<compile_context>
chip_gen: v6e
topology: v6e:2x2x1
jax: 0.10.0
libtpu: 0.0.40
codegen_flags: <defaults>
</compile_context>

<pallas_src>
import jax
import jax.numpy as jnp
from jax.experimental import pallas as pl
from jax.experimental.pallas import tpu as pltpu

LANE = 128  # TPU lane width (last dim)
SUB = 8     # f32/bf16 sublane row multiple


def _round_up(x, m):
    return ((x + m - 1) // m) * m


def qnet_kernel(x_ref, w1_ref, b1_ref, w2_ref, b2_ref, w3_ref, b3_ref, o_ref):
    # fc1 -> relu   (bf16 operands, f32 accumulate)
    x = x_ref[...]                                                       # (TB, S) bf16
    h1 = jnp.dot(x, w1_ref[...], preferred_element_type=jnp.float32) + b1_ref[...]
    h1 = jnp.maximum(h1, 0.0).astype(jnp.bfloat16)                       # (TB, HP)
    # fc2 -> relu
    h2 = jnp.dot(h1, w2_ref[...], preferred_element_type=jnp.float32) + b2_ref[...]
    h2 = jnp.maximum(h2, 0.0).astype(jnp.bfloat16)                       # (TB, HP)
    # fc3 (no activation) -> Q-values; unpadded (TB, A) f32 store
    o_ref[...] = (jnp.dot(h2, w3_ref[...], preferred_element_type=jnp.float32)
                  + b3_ref[...]).astype(o_ref.dtype)                     # (TB, A)


def prepare_params(params):
    """Pad hidden dim to the 128-lane width and cast weights to bf16.

    Call ONCE at init / after each parameter update (not per forward): this
    moves 6 pad/cast XLA ops and their dispatch latency out of the hot path.
    Only the hidden (64 -> 128) dim is padded; the K dim of fc1 (state_dim) and
    the N dim of fc3 (action_dim) stay at their logical sizes.
    """
    w1, b1 = params["w1"], params["b1"]
    w2, b2 = params["w2"], params["b2"]
    w3, b3 = params["w3"], params["b3"]
    S, H = w1.shape
    A = w3.shape[1]
    HP = _round_up(H, LANE)

    def pad2(a, rows, cols, dtype):
        return jnp.pad(a, ((0, rows - a.shape[0]), (0, cols - a.shape[1]))).astype(dtype)

    return {
        "w1": pad2(w1, S, HP, jnp.bfloat16),    # (S,  HP)
        "b1": pad2(b1, 1, HP, jnp.float32),     # (1,  HP)
        "w2": pad2(w2, HP, HP, jnp.bfloat16),   # (HP, HP)
        "b2": pad2(b2, 1, HP, jnp.float32),     # (1,  HP)
        "w3": pad2(w3, HP, A, jnp.bfloat16),    # (HP, A)   N stays unpadded
        "b3": b3.astype(jnp.float32),           # (1,  A)
    }


def _batch_tiling(B, tb):
    """Pick (TB, n_tiles) so tail padding is < 8 rows and, for large batches,
    the grid has >= 2 steps (lets v7x shard the 'parallel' axis over 2 TCs)."""
    n_tiles = max(pl.cdiv(B, tb), 1)
    if n_tiles == 1 and B >= 64:     # big enough to split across v7x's 2 TCs
        n_tiles = 2
    tile = _round_up(pl.cdiv(B, n_tiles), SUB)
    n_tiles = pl.cdiv(B, tile)       # rounding may have shrunk the tile count
    return tile, n_tiles


def qnetwork_forward(state, prepared, *, tb=1024):
    """state: (B, state_dim) f32.  prepared: output of prepare_params()."""
    w1, b1 = prepared["w1"], prepared["b1"]
    w2, b2 = prepared["w2"], prepared["b2"]
    w3, b3 = prepared["w3"], prepared["b3"]

    B, S = state.shape
    assert w1.shape[0] == S, "state_dim mismatch with prepared params"
    HP = w1.shape[1]
    A = w3.shape[1]

    TB, n_tiles = _batch_tiling(B, tb)
    B_pad = TB * n_tiles

    # Only batch-row padding (< 8 rows beyond the tile rounding); no lane padding.
    x = state.astype(jnp.bfloat16)
    if B_pad != B:
        x = jnp.pad(x, ((0, B_pad - B), (0, 0)))

    # Weights/biases: constant index map -> fetched once, VMEM-resident across grid steps.
    resident = lambda a: pl.BlockSpec(a.shape, lambda i: (0, 0))

    flops = 2 * B_pad * (S * HP + HP * HP + HP * A)
    bytes_accessed = (B_pad * S * 2
                      + (w1.size + w2.size + w3.size) * 2
                      + (b1.size + b2.size + b3.size) * 4
                      + B_pad * A * 4)

    out = pl.pallas_call(
        qnet_kernel,
        out_shape=jax.ShapeDtypeStruct((B_pad, A), jnp.float32),
        grid=(n_tiles,),
        in_specs=[
            pl.BlockSpec((TB, S), lambda i: (i, 0)),    # state tiles stream over the grid
            resident(w1), resident(b1),
            resident(w2), resident(b2),
            resident(w3), resident(b3),
        ],
        out_specs=pl.BlockSpec((TB, A), lambda i: (i, 0)),
        compiler_params=pltpu.CompilerParams(
            dimension_semantics=("parallel",),          # v7x: shard tiles across 2 TCs
            vmem_limit_bytes=32 * 1024 * 1024,
        ),
        cost_estimate=pl.CostEstimate(flops=flops, transcendentals=0,
                                      bytes_accessed=bytes_accessed),
    )(x, w1, b1, w2, b2, w3, b3)

    return out[:B] if B_pad != B else out


def init_params(key, state_dim, action_dim, hidden_dim=64):
    """He (kaiming_normal, fan_in, relu) init like the PyTorch module; biases = 0.
    Weights are stored already transposed to (in, out)."""
    k1, k2, k3 = jax.random.split(key, 3)

    def he(k, fan_in, fan_out):
        std = (2.0 / fan_in) ** 0.5
        # PyTorch stores (out, in); generate in that convention then transpose.
        w = jax.random.normal(k, (fan_out, fan_in), dtype=jnp.float32) * std
        return w.T  # (in, out)

    return {
        "w1": he(k1, state_dim, hidden_dim),
        "b1": jnp.zeros((1, hidden_dim), jnp.float32),
        "w2": he(k2, hidden_dim, hidden_dim),
        "b2": jnp.zeros((1, hidden_dim), jnp.float32),
        "w3": he(k3, hidden_dim, action_dim),
        "b3": jnp.zeros((1, action_dim), jnp.float32),
    }


def qnetwork_ref(state, params):
    """Pure-JAX f32 reference for sanity check."""
    h1 = jnp.maximum(state @ params["w1"] + params["b1"], 0.0)
    h2 = jnp.maximum(h1 @ params["w2"] + params["b2"], 0.0)
    return h2 @ params["w3"] + params["b3"]


if __name__ == "__main__":
    batch, state_dim, action_dim, hidden_dim = 2, 8, 4, 64

    key = jax.random.PRNGKey(0)
    k_params, k_state = jax.random.split(key)
    params = init_params(k_params, state_dim, action_dim, hidden_dim)
    prepared = prepare_params(params)   # pad/cast once, outside the hot path
    state = jax.random.normal(k_state, (batch, state_dim), dtype=jnp.float32)

    q_values = jax.block_until_ready(qnetwork_forward(state, prepared))

    # correctness check against pure-JAX f32 reference (kernel uses bf16 operands
    # with f32 accumulation, so tolerance is loosened accordingly)
    q_ref = qnetwork_ref(state, params)
    assert q_values.shape == (batch, action_dim)
    assert jnp.allclose(q_values, q_ref, atol=5e-2, rtol=5e-2), (
        f"max abs err {jnp.max(jnp.abs(q_values - q_ref))}")

    # also exercise an odd, multi-tile batch (replay-buffer-like) to verify the
    # adaptive tiling / grid path
    big_state = jax.random.normal(jax.random.PRNGKey(1), (600, state_dim), jnp.float32)
    q_big = jax.block_until_ready(qnetwork_forward(big_state, prepared))
    q_big_ref = qnetwork_ref(big_state, params)
    assert q_big.shape == (600, action_dim)
    assert jnp.allclose(q_big, q_big_ref, atol=5e-2, rtol=5e-2), (
        f"max abs err {jnp.max(jnp.abs(q_big - q_big_ref))}")

    print("KERNEL_OK")
</pallas_src>

<mosaic_0001>
module attributes {stable_mosaic.version = 11 : i64} {
  func.func @qnet_kernel(%arg0: i32, %arg1: memref<8x8xbf16, #tpu.memory_space<vmem>>, %arg2: memref<8x128xbf16, #tpu.memory_space<vmem>>, %arg3: memref<1x128xf32, #tpu.memory_space<vmem>>, %arg4: memref<128x128xbf16, #tpu.memory_space<vmem>>, %arg5: memref<1x128xf32, #tpu.memory_space<vmem>>, %arg6: memref<128x4xbf16, #tpu.memory_space<vmem>>, %arg7: memref<1x4xf32, #tpu.memory_space<vmem>>, %arg8: memref<8x4xf32, #tpu.memory_space<vmem>>) attributes {dimension_semantics = [#tpu.dimension_semantics<parallel>], iteration_bounds = array<i64: 1>, scalar_prefetch = 0 : i64, scratch_operands = 0 : i64, tpu.core_type = #tpu.core_type<tc>, window_params = [{transform_indices = @transform_0, window_bounds = array<i64: 8, 8>}, {pipeline_mode = #tpu.pipeline_mode<synchronous>, transform_indices = @transform_1, window_bounds = array<i64: 8, 128>}, {pipeline_mode = #tpu.pipeline_mode<synchronous>, transform_indices = @transform_2, window_bounds = array<i64: 1, 128>}, {pipeline_mode = #tpu.pipeline_mode<synchronous>, transform_indices = @transform_3, window_bounds = array<i64: 128, 128>}, {pipeline_mode = #tpu.pipeline_mode<synchronous>, transform_indices = @transform_4, window_bounds = array<i64: 1, 128>}, {pipeline_mode = #tpu.pipeline_mode<synchronous>, transform_indices = @transform_5, window_bounds = array<i64: 128, 4>}, {pipeline_mode = #tpu.pipeline_mode<synchronous>, transform_indices = @transform_6, window_bounds = array<i64: 1, 4>}, {transform_indices = @transform_7, window_bounds = array<i64: 8, 4>}]} {
    %c0 = arith.constant 0 : index
    %c0_0 = arith.constant 0 : index
    %0 = vector.load %arg1[%c0, %c0_0] : memref<8x8xbf16, #tpu.memory_space<vmem>>, vector<8x8xbf16>
    %c0_1 = arith.constant 0 : index
    %c0_2 = arith.constant 0 : index
    %1 = vector.load %arg2[%c0_1, %c0_2] : memref<8x128xbf16, #tpu.memory_space<vmem>>, vector<8x128xbf16>
    %cst = arith.constant dense<0.000000e+00> : vector<8x128xf32>
    %2 = tpu.matmul %0, %1, %cst {dimension_numbers = #tpu.dot_dimension_numbers<[1], [0], [0], [1], [0, 0, 1, 1], [], []>} : vector<8x8xbf16>, vector<8x128xbf16>, vector<8x128xf32> -> vector<8x128xf32>
    %c0_3 = arith.constant 0 : index
    %c0_4 = arith.constant 0 : index
    %3 = vector.load %arg3[%c0_3, %c0_4] : memref<1x128xf32, #tpu.memory_space<vmem>>, vector<1x128xf32>
    %4 = vector.broadcast %3 : vector<1x128xf32> to vector<8x128xf32>
    %5 = arith.addf %2, %4 : vector<8x128xf32>
    %cst_5 = arith.constant 0.000000e+00 : f32
    %6 = vector.broadcast %cst_5 : f32 to vector<8x128xf32>
    %7 = arith.maximumf %5, %6 : vector<8x128xf32>
    %8 = arith.truncf %7 : vector<8x128xf32> to vector<8x128xbf16>
    %c0_6 = arith.constant 0 : index
    %c0_7 = arith.constant 0 : index
    %9 = vector.load %arg4[%c0_6, %c0_7] : memref<128x128xbf16, #tpu.memory_space<vmem>>, vector<128x128xbf16>
    %cst_8 = arith.constant dense<0.000000e+00> : vector<8x128xf32>
    %10 = tpu.matmul %8, %9, %cst_8 {dimension_numbers = #tpu.dot_dimension_numbers<[1], [0], [0], [1], [0, 0, 1, 1], [], []>} : vector<8x128xbf16>, vector<128x128xbf16>, vector<8x128xf32> -> vector<8x128xf32>
    %c0_9 = arith.constant 0 : index
    %c0_10 = arith.constant 0 : index
    %11 = vector.load %arg5[%c0_9, %c0_10] : memref<1x128xf32, #tpu.memory_space<vmem>>, vector<1x128xf32>
    %12 = vector.broadcast %11 : vector<1x128xf32> to vector<8x128xf32>
    %13 = arith.addf %10, %12 : vector<8x128xf32>
    %cst_11 = arith.constant 0.000000e+00 : f32
    %14 = vector.broadcast %cst_11 : f32 to vector<8x128xf32>
    %15 = arith.maximumf %13, %14 : vector<8x128xf32>
    %16 = arith.truncf %15 : vector<8x128xf32> to vector<8x128xbf16>
    %c0_12 = arith.constant 0 : index
    %c0_13 = arith.constant 0 : index
    %17 = vector.load %arg6[%c0_12, %c0_13] : memref<128x4xbf16, #tpu.memory_space<vmem>>, vector<128x4xbf16>
    %cst_14 = arith.constant dense<0.000000e+00> : vector<8x4xf32>
    %18 = tpu.matmul %16, %17, %cst_14 {dimension_numbers = #tpu.dot_dimension_numbers<[1], [0], [0], [1], [0, 0, 1, 1], [], []>} : vector<8x128xbf16>, vector<128x4xbf16>, vector<8x4xf32> -> vector<8x4xf32>
    %c0_15 = arith.constant 0 : index
    %c0_16 = arith.constant 0 : index
    %19 = vector.load %arg7[%c0_15, %c0_16] : memref<1x4xf32, #tpu.memory_space<vmem>>, vector<1x4xf32>
    %20 = vector.broadcast %19 : vector<1x4xf32> to vector<8x4xf32>
    %21 = arith.addf %18, %20 : vector<8x4xf32>
    %c0_17 = arith.constant 0 : index
    %c0_18 = arith.constant 0 : index
    %22 = vector.load %arg8[%c0_17, %c0_18] : memref<8x4xf32, #tpu.memory_space<vmem>>, vector<8x4xf32>
    tpu.vector_store %arg8[%c0_17, %c0_18], %21 {strides = array<i32>} : memref<8x4xf32, #tpu.memory_space<vmem>>, vector<8x4xf32>,
    return
  }
  func.func @transform_0(%arg0: i32) -> (i32, i32) {
    %c0_i32 = arith.constant 0 : i32
    %c0_i32_0 = arith.constant 0 : i32
    return %arg0, %c0_i32 : i32, i32
  }
  func.func @transform_1(%arg0: i32) -> (i32, i32) {
    %c0_i32 = arith.constant 0 : i32
    %c0_i32_0 = arith.constant 0 : i32
    %c0_i32_1 = arith.constant 0 : i32
    return %c0_i32, %c0_i32_0 : i32, i32
  }
  func.func @transform_2(%arg0: i32) -> (i32, i32) {
    %c0_i32 = arith.constant 0 : i32
    %c0_i32_0 = arith.constant 0 : i32
    %c0_i32_1 = arith.constant 0 : i32
    return %c0_i32, %c0_i32_0 : i32, i32
  }
  func.func @transform_3(%arg0: i32) -> (i32, i32) {
    %c0_i32 = arith.constant 0 : i32
    %c0_i32_0 = arith.constant 0 : i32
    %c0_i32_1 = arith.constant 0 : i32
    return %c0_i32, %c0_i32_0 : i32, i32
  }
  func.func @transform_4(%arg0: i32) -> (i32, i32) {
    %c0_i32 = arith.constant 0 : i32
    %c0_i32_0 = arith.constant 0 : i32
    %c0_i32_1 = arith.constant 0 : i32
    return %c0_i32, %c0_i32_0 : i32, i32
  }
  func.func @transform_5(%arg0: i32) -> (i32, i32) {
    %c0_i32 = arith.constant 0 : i32
    %c0_i32_0 = arith.constant 0 : i32
    %c0_i32_1 = arith.constant 0 : i32
    return %c0_i32, %c0_i32_0 : i32, i32
  }
  func.func @transform_6(%arg0: i32) -> (i32, i32) {
    %c0_i32 = arith.constant 0 : i32
    %c0_i32_0 = arith.constant 0 : i32
    %c0_i32_1 = arith.constant 0 : i32
    return %c0_i32, %c0_i32_0 : i32, i32
  }
  func.func @transform_7(%arg0: i32) -> (i32, i32) {
    %c0_i32 = arith.constant 0 : i32
    %c0_i32_0 = arith.constant 0 : i32
    return %arg0, %c0_i32 : i32, i32
  }
}

</mosaic_0001>

<llo_original>
// kernel: tpu_custom_call.1
$region0: #{tpu_custom_call.1}
  #allocation0 [shape = 'u32[]', space=smem, size = 0x4, offset = 0x4, fixed_abs, tag = 'smem constant byte address 0x4 - core index']
  #allocation1 [shape = 'u32[144,128]{1,0:T(1,128)}', space=vmem, size = 0x12000, scoped, tag = 'internal scratch']
  %s0 = inlined_call_operand.vmem [shape: bf16[8,8], index: 0, kind: input, shape index: {}]
  %s1 = inlined_call_operand.hbm [shape: bf16[8,128], index: 1, kind: input, shape index: {}]
  %s2 = inlined_call_operand.vmem [shape: f32[1,128], index: 2, kind: input, shape index: {}]
  %s3 = inlined_call_operand.vmem [shape: bf16[128,128], index: 3, kind: input, shape index: {}]
  %s4 = inlined_call_operand.vmem [shape: f32[1,128], index: 4, kind: input, shape index: {}]
  %s5 = inlined_call_operand.vmem [shape: bf16[128,4], index: 5, kind: input, shape index: {}]
  %s6 = inlined_call_operand.vmem [shape: f32[1,4], index: 6, kind: input, shape index: {}]
  %s7 = inlined_call_operand.vmem [shape: f32[8,4], index: 7, kind: output, shape index: {}]
  %s8 = sld [smem:[#allocation0]]
  $region42: #{tpu_custom_call.1} parent=0
    _
  %s10 = ssub.s32 1, %s8
  %s11 = scalar_select 0, %s10, %s8
  $region1: #{tpu_custom_call.1} parent=0
    #allocation2 [shape = 'u8[2048]{0}', space=vmem, size = 0x800, scoped, tag = 'input window, operand 1, single buffered']
    #allocation3 [shape = 's32[1]{0}', space=sflag, size = 0x4, scoped, tag = 'scoped memory for tpu_custom_call.1']
    %12 = vsyncpa [#allocation3], 0
    // Predicated region
    $region2: #{tpu_custom_call.1} parent=1 // pred_check
      _
    $region3: #{tpu_custom_call.1} parent=1 // pred_check_branch
      %14 = sbr.rel (0) target = $region5
    $region4: #{tpu_custom_call.1} parent=1 // pred_region
      _
    $region5: #{tpu_custom_call.1} parent=1 // pred_fallthru
      _
    // Predicated region
    $region6: #{tpu_custom_call.1} parent=1 // pred_check
      _
    $region7: #{tpu_custom_call.1} parent=1 // pred_check_branch
      %16 = sbr.rel (0) target = $region9
    $region8: #{tpu_custom_call.1} parent=1 // pred_region
      %s18 = ssub.s32 64, 64
      %19 = vsyncadd [#allocation3], %s18
      %s21 = sshll.u32 [#allocation2], 4
      %s22 = int_to_ptr.vmem [resolvable:$true] %s21
      %24 = dma.hbm_to_vmem [thread:$0]  %s1, 64, %s22, [#allocation3]
    $region9: #{tpu_custom_call.1} parent=1 // pred_fallthru
      _
    // Predicated region
    $region10: #{tpu_custom_call.1} parent=1 // pred_check
      _
    $region11: #{tpu_custom_call.1} parent=1 // pred_check_branch
      %26 = sbr.rel (0) target = $region13
    $region12: #{tpu_custom_call.1} parent=1 // pred_region
      _
    $region13: #{tpu_custom_call.1} parent=1 // pred_fallthru
      _
    // Predicated region
    $region14: #{tpu_custom_call.1} parent=1 // pred_check
      _
    $region15: #{tpu_custom_call.1} parent=1 // pred_check_branch
      %28 = sbr.rel (0) target = $region17
    $region16: #{tpu_custom_call.1} parent=1 // pred_region
      _
    $region17: #{tpu_custom_call.1} parent=1 // pred_fallthru
      _
    // Predicated region
    $region18: #{tpu_custom_call.1} parent=1 // pred_check
      _
    $region19: #{tpu_custom_call.1} parent=1 // pred_check_branch
      %30 = sbr.rel (0) target = $region21
    $region20: #{tpu_custom_call.1} parent=1 // pred_region
      _
    $region21: #{tpu_custom_call.1} parent=1 // pred_fallthru
      _
    // Predicated region
    $region22: #{tpu_custom_call.1} parent=1 // pred_check
      _
    $region23: #{tpu_custom_call.1} parent=1 // pred_check_branch
      %32 = sbr.rel (0) target = $region25
    $region24: #{tpu_custom_call.1} parent=1 // pred_region
      _
    $region25: #{tpu_custom_call.1} parent=1 // pred_fallthru
      _
    // Predicated region
    $region26: #{tpu_custom_call.1} parent=1 // pred_check
      _
    $region27: #{tpu_custom_call.1} parent=1 // pred_check_branch
      %34 = sbr.rel (0) target = $region29
    $region28: #{tpu_custom_call.1} parent=1 // pred_region
      _
    $region29: #{tpu_custom_call.1} parent=1 // pred_fallthru
      _
    // Predicated region
    $region30: #{tpu_custom_call.1} parent=1 // pred_check
      _
    $region31: #{tpu_custom_call.1} parent=1 // pred_check_branch
      %36 = sbr.rel (0) target = $region33
    $region32: #{tpu_custom_call.1} parent=1 // pred_region
      %37 = dma.done [#allocation3], 64
    $region33: #{tpu_custom_call.1} parent=1 // pred_fallthru
      _
    %v39 = vld [vmem:[%s0] sm:$0xf]
    %v40 = vld [vmem:[#allocation2] sm:$0xf]
    %v41 = vld [vmem:[%s2] sm:$0x1]
    %v43 = vlaneseq
    %v44 = vshrl.u32 %v43, 7
    %v45 = vsub.s32 0, %v44
    %v46 = vrot.slane %v41, %v45
    %vm48 = vcmask 64512
    %v50 = vsel %vm48, %v39, 0
    %vm52 = vcmask 1043456
    %v54 = vsel %vm52, %v40, 0
    %56 = vmatprep.subr.bf16.mxu0 0
    %57 = vmatpush1.bf16.msra.mxu0 0
    %58 = vmatprep.subr.bf16.mxu0 0
    %59 = vmatpush1.bf16.msra.mxu0 0
    %60 = vmatprep.subr.bf16.mxu0 0
    %61 = vmatpush1.bf16.msra.mxu0 0
    %62 = vmatprep.subr.bf16.mxu0 0
    %63 = vmatpush1.bf16.msra.mxu0 0
    %64 = vmatprep.subr.bf16.mxu0 0
    %65 = vmatpush1.bf16.msra.mxu0 0
    %66 = vmatprep.subr.bf16.mxu0 0
    %67 = vmatpush1.bf16.msra.mxu0 0
    %68 = vmatprep.subr.bf16.mxu0 0
    %69 = vmatpush1.bf16.msra.mxu0 0
    %70 = vmatprep.subr.bf16.mxu0 0
    %71 = vmatpush1.bf16.msra.mxu0 %v54
    %72 = vmatprep.subr.bf16.mxu0 0
    %73 = vmatpush2.bf16.msra.mxu0 0
    %74 = vmatprep.subr.bf16.mxu0 0
    %75 = vmatpush2.bf16.msra.mxu0 0
    %76 = vmatprep.subr.bf16.mxu0 0
    %77 = vmatpush2.bf16.msra.mxu0 0
    %78 = vmatprep.subr.bf16.mxu0 0
    %79 = vmatpush2.bf16.msra.mxu0 0
    %80 = vmatprep.subr.bf16.mxu0 0
    %81 = vmatpush2.bf16.msra.mxu0 0
    %82 = vmatprep.subr.bf16.mxu0 0
    %83 = vmatpush2.bf16.msra.mxu0 0
    %84 = vmatprep.subr.bf16.mxu0 0
    %85 = vmatpush2.bf16.msra.mxu0 0
    %86 = vmatprep.subr.bf16.mxu0 0
    %87 = vmatpush2.bf16.msra.mxu0 0
    %88 = vmatprep.mubr.bf16.mxu0 0
    %89 = vmatmul.mubr.bf16.gmra.mxu0 %v50
    %v90 = vpop.f32.mrf.mxu0
    %v91 = vadd.f32 %v46, %v90
    %v92 = vpop.f32.mrf.mxu0
    %v93 = vpop.f32.mrf.mxu0
    %v94 = vpop.f32.mrf.mxu0
    %95 = vdwg.mxu0
    %v96 = vmax.f32 %v91, 0.0
    %v97 = vpack.c.bf16 %v96, %v96
    %v98 = vld [vmem:[%s3] sm:$0xf]
    %v99 = vld [vmem:[%s3 + $0x4] sm:$0xf]
    %v100 = vld [vmem:[%s3 + $0x8] sm:$0xf]
    %v101 = vld [vmem:[%s3 + $0xc] sm:$0xf]
    %v102 = vld [vmem:[%s3 + $0x10] sm:$0xf]
    %v103 = vld [vmem:[%s3 + $0x14] sm:$0xf]
    %v104 = vld [vmem:[%s3 + $0x18] sm:$0xf]
    %v105 = vld [vmem:[%s3 + $0x1c] sm:$0xf]
    %v106 = vld [vmem:[%s3 + $0x20] sm:$0xf]
    %v107 = vld [vmem:[%s3 + $0x24] sm:$0xf]
    %v108 = vld [vmem:[%s3 + $0x28] sm:$0xf]
    %v109 = vld [vmem:[%s3 + $0x2c] sm:$0xf]
    %v110 = vld [vmem:[%s3 + $0x30] sm:$0xf]
    %v111 = vld [vmem:[%s3 + $0x34] sm:$0xf]
    %v112 = vld [vmem:[%s3 + $0x38] sm:$0xf]
    %v113 = vld [vmem:[%s3 + $0x3c] sm:$0xf]
    %v114 = vld [vmem:[%s4] sm:$0x1]
    %v116 = vlaneseq
    %v117 = vshrl.u32 %v116, 7
    %v118 = vsub.s32 0, %v117
    %v119 = vrot.slane %v114, %v118
    %v137 = vunpack.c.l.b16 %v98
    %v138 = vunpack.c.l.b16 %v99
    %v139 = vunpack.c.l.b16 %v100
    %v140 = vunpack.c.l.b16 %v101
    %v141 = vunpack.c.l.b16 %v102
    %v142 = vunpack.c.l.b16 %v103
    %v143 = vunpack.c.l.b16 %v104
    %v144 = vunpack.c.l.b16 %v105
    %v145 = vunpack.c.l.b16 %v106
    %v146 = vunpack.c.l.b16 %v107
    %v147 = vunpack.c.l.b16 %v108
    %v148 = vunpack.c.l.b16 %v109
    %v149 = vunpack.c.l.b16 %v110
    %v150 = vunpack.c.l.b16 %v111
    %v151 = vunpack.c.l.b16 %v112
    %v152 = vunpack.c.l.b16 %v113
    %v153 = vpack.c.b16 %v138, %v137
    %v154 = vpack.c.b16 %v140, %v139
    %v155 = vpack.c.b16 %v142, %v141
    %v156 = vpack.c.b16 %v144, %v143
    %v157 = vpack.c.b16 %v146, %v145
    %v158 = vpack.c.b16 %v148, %v147
    %v159 = vpack.c.b16 %v150, %v149
    %v160 = vpack.c.b16 %v152, %v151
    %169 = vmatprep.subr.bf16.mxu0 0
    %170 = vmatpush1.bf16.msra.mxu0 %v160
    %171 = vmatprep.subr.bf16.mxu0 0
    %172 = vmatpush1.bf16.msra.mxu0 %v159
    %173 = vmatprep.subr.bf16.mxu0 0
    %174 = vmatpush1.bf16.msra.mxu0 %v158
    %175 = vmatprep.subr.bf16.mxu0 0
    %176 = vmatpush1.bf16.msra.mxu0 %v157
    %177 = vmatprep.subr.bf16.mxu0 0
    %178 = vmatpush1.bf16.msra.mxu0 %v156
    %179 = vmatprep.subr.bf16.mxu0 0
    %180 = vmatpush1.bf16.msra.mxu0 %v155
    %181 = vmatprep.subr.bf16.mxu0 0
    %182 = vmatpush1.bf16.msra.mxu0 %v154
    %183 = vmatprep.subr.bf16.mxu0 0
    %184 = vmatpush1.bf16.msra.mxu0 %v153
    %185 = vmatprep.subr.bf16.mxu0 0
    %186 = vmatpush2.bf16.msra.mxu0 0
    %187 = vmatprep.subr.bf16.mxu0 0
    %188 = vmatpush2.bf16.msra.mxu0 0
    %189 = vmatprep.subr.bf16.mxu0 0
    %190 = vmatpush2.bf16.msra.mxu0 0
    %191 = vmatprep.subr.bf16.mxu0 0
    %192 = vmatpush2.bf16.msra.mxu0 0
    %193 = vmatprep.subr.bf16.mxu0 0
    %194 = vmatpush2.bf16.msra.mxu0 0
    %195 = vmatprep.subr.bf16.mxu0 0
    %196 = vmatpush2.bf16.msra.mxu0 0
    %197 = vmatprep.subr.bf16.mxu0 0
    %198 = vmatpush2.bf16.msra.mxu0 0
    %199 = vmatprep.subr.bf16.mxu0 0
    %200 = vmatpush2.bf16.msra.mxu0 0
    %201 = vmatprep.mubr.bf16.mxu0 0
    %202 = vmatmul.mubr.bf16.gmra.mxu0 %v97
    %v203 = vpop.f32.mrf.mxu0
    %v204 = vadd.f32 %v119, %v203
    %v205 = vpop.f32.mrf.mxu0
    %v206 = vpop.f32.mrf.mxu0
    %v207 = vpop.f32.mrf.mxu0
    %208 = vdwg.mxu0
    %v209 = vmax.f32 %v204, 0.0
    %v210 = vpack.c.bf16 %v209, %v209
    %v211 = vld [vmem:[%s5] sm:$0xf]
    %v212 = vld [vmem:[%s5 + $0x4] sm:$0xf]
    %v213 = vld [vmem:[%s5 + $0x8] sm:$0xf]
    %v214 = vld [vmem:[%s5 + $0xc] sm:$0xf]
    %v215 = vld [vmem:[%s5 + $0x10] sm:$0xf]
    %v216 = vld [vmem:[%s5 + $0x14] sm:$0xf]
    %v217 = vld [vmem:[%s5 + $0x18] sm:$0xf]
    %v218 = vld [vmem:[%s5 + $0x1c] sm:$0xf]
    %v219 = vld [vmem:[%s5 + $0x20] sm:$0xf]
    %v220 = vld [vmem:[%s5 + $0x24] sm:$0xf]
    %v221 = vld [vmem:[%s5 + $0x28] sm:$0xf]
    %v222 = vld [vmem:[%s5 + $0x2c] sm:$0xf]
    %v223 = vld [vmem:[%s5 + $0x30] sm:$0xf]
    %v224 = vld [vmem:[%s5 + $0x34] sm:$0xf]
    %v225 = vld [vmem:[%s5 + $0x38] sm:$0xf]
    %v226 = vld [vmem:[%s5 + $0x3c] sm:$0xf]
    %v227 = vld [vmem:[%s6] sm:$0x1]
    %v229 = vlaneseq
    %v230 = vshrl.u32 %v229, 7
    %v231 = vsub.s32 0, %v230
    %v232 = vrot.slane %v227, %v231
    %v250 = vunpack.c.l.b16 %v211
    %v251 = vunpack.c.l.b16 %v212
    %v252 = vunpack.c.l.b16 %v213
    %v253 = vunpack.c.l.b16 %v214
    %v254 = vunpack.c.l.b16 %v215
    %v255 = vunpack.c.l.b16 %v216
    %v256 = vunpack.c.l.b16 %v217
    %v257 = vunpack.c.l.b16 %v218
    %v258 = vunpack.c.l.b16 %v219
    %v259 = vunpack.c.l.b16 %v220
    %v260 = vunpack.c.l.b16 %v221
    %v261 = vunpack.c.l.b16 %v222
    %v262 = vunpack.c.l.b16 %v223
    %v263 = vunpack.c.l.b16 %v224
    %v264 = vunpack.c.l.b16 %v225
    %v265 = vunpack.c.l.b16 %v226
    %v266 = vpack.c.b16 %v251, %v250
    %v267 = vpack.c.b16 %v253, %v252
    %v268 = vpack.c.b16 %v255, %v254
    %v269 = vpack.c.b16 %v257, %v256
    %v270 = vpack.c.b16 %v259, %v258
    %v271 = vpack.c.b16 %v261, %v260
    %v272 = vpack.c.b16 %v263, %v262
    %v273 = vpack.c.b16 %v265, %v264
    %282 = vmatprep.subr.bf16.mxu0 0
    %283 = vmatpush1.bf16.msra.mxu0 %v273
    %284 = vmatprep.subr.bf16.mxu0 0
    %285 = vmatpush1.bf16.msra.mxu0 %v272
    %286 = vmatprep.subr.bf16.mxu0 0
    %287 = vmatpush1.bf16.msra.mxu0 %v271
    %288 = vmatprep.subr.bf16.mxu0 0
    %289 = vmatpush1.bf16.msra.mxu0 %v270
    %290 = vmatprep.subr.bf16.mxu0 0
    %291 = vmatpush1.bf16.msra.mxu0 %v269
    %292 = vmatprep.subr.bf16.mxu0 0
    %293 = vmatpush1.bf16.msra.mxu0 %v268
    %294 = vmatprep.subr.bf16.mxu0 0
    %295 = vmatpush1.bf16.msra.mxu0 %v267
    %296 = vmatprep.subr.bf16.mxu0 0
    %297 = vmatpush1.bf16.msra.mxu0 %v266
    %298 = vmatprep.subr.bf16.mxu0 0
    %299 = vmatpush2.bf16.msra.mxu0 0
    %300 = vmatprep.subr.bf16.mxu0 0
    %301 = vmatpush2.bf16.msra.mxu0 0
    %302 = vmatprep.subr.bf16.mxu0 0
    %303 = vmatpush2.bf16.msra.mxu0 0
    %304 = vmatprep.subr.bf16.mxu0 0
    %305 = vmatpush2.bf16.msra.mxu0 0
    %306 = vmatprep.subr.bf16.mxu0 0
    %307 = vmatpush2.bf16.msra.mxu0 0
    %308 = vmatprep.subr.bf16.mxu0 0
    %309 = vmatpush2.bf16.msra.mxu0 0
    %310 = vmatprep.subr.bf16.mxu0 0
    %311 = vmatpush2.bf16.msra.mxu0 0
    %312 = vmatprep.subr.bf16.mxu0 0
    %313 = vmatpush2.bf16.msra.mxu0 0
    %314 = vmatprep.mubr.bf16.mxu0 0
    %315 = vmatmul.mubr.bf16.gmra.mxu0 %v210
    %v316 = vpop.f32.mrf.mxu0
    %v317 = vadd.f32 %v232, %v316
    %v318 = vpop.f32.mrf.mxu0
    %v319 = vpop.f32.mrf.mxu0
    %v320 = vpop.f32.mrf.mxu0
    %321 = vdwg.mxu0
    %vm322 = vcmask 31744
    %323 = vst.msk [vmem:[%s7] sm:$0xff] %vm322, %v317
    // Predicated region
    $region34: #{tpu_custom_call.1} parent=1 // pred_check
      _
    $region35: #{tpu_custom_call.1} parent=1 // pred_check_branch
      %325 = sbr.rel (0) target = $region37
    $region36: #{tpu_custom_call.1} parent=1 // pred_region
      _
    $region37: #{tpu_custom_call.1} parent=1 // pred_fallthru
      _
    // Predicated region
    $region38: #{tpu_custom_call.1} parent=1 // pred_check
      _
    $region39: #{tpu_custom_call.1} parent=1 // pred_check_branch
      %327 = sbr.rel (0) target = $region41
    $region40: #{tpu_custom_call.1} parent=1 // pred_region
      _
    $region41: #{tpu_custom_call.1} parent=1 // pred_fallthru
      _
    %328 = vsyncpa [#allocation3], 1

</llo_original>
